<compile_context>
chip_gen: v5e
topology: v5e:2x2
jax: 0.10.0
libtpu: 0.0.40
codegen_flags: <defaults>
</compile_context>

<pallas_src>
import functools

import jax
import jax.numpy as jnp
from jax.experimental import pallas as pl
from jax.experimental.pallas import tpu as pltpu


def _round_up(n, m):
    return ((n + m - 1) // m) * m


def _sublane(dtype):
    # Sublane packing multiple for the second-to-last dim of a VMEM tile.
    return {1: 32, 2: 16, 4: 8, 8: 4}.get(jnp.dtype(dtype).itemsize, 8)


def _tpu_vmem_and_cores():
    """Best-effort (vmem_capacity_bytes, tensorcores_per_chip) with safe fallbacks."""
    vmem_cap = 64 * 1024 * 1024   # conservative default (v7x per-core VMEM)
    n_cores = 2                   # assume megacore-capable unless told otherwise
    try:
        info = pltpu.get_tpu_info()
        cap = getattr(info, "vmem_capacity_bytes", None)
        if cap:
            vmem_cap = int(cap)
        for name in ("num_cores", "core_count", "num_tensorcores", "tensorcore_count"):
            c = getattr(info, name, None)
            if c:
                n_cores = int(c)
                break
    except Exception:
        pass
    return vmem_cap, n_cores


def _gap_kernel(x_ref, o_ref, acc_ref, *, inv_hw, hw_total, hw_tile, ragged):
    # x_ref: (Bt, Ct, HWt) tile; o_ref: (Bt, Ct) tile; acc_ref: (Bt, Ct) f32 scratch.
    h = pl.program_id(2)

    @pl.when(h == 0)
    def _init():
        acc_ref[...] = jnp.zeros_like(acc_ref)

    x = x_ref[...]
    if ragged:
        # Mask out-of-range spatial positions of the last (ragged) HW tile.
        lane = jax.lax.broadcasted_iota(jnp.int32, x.shape, 2)
        valid = (h * hw_tile + lane) < hw_total
        x = jnp.where(valid, x, jnp.zeros_like(x))

    # Lane-axis reduce with f32 accumulation (no f32 copy of the tile in HBM).
    acc_ref[...] += jnp.sum(x, axis=-1, dtype=jnp.float32)

    @pl.when(h == pl.num_programs(2) - 1)
    def _finalize():
        o_ref[...] = (acc_ref[...] * inv_hw).astype(o_ref.dtype)


def global_avg_pool_nchw(x_bc_hw, *, vmem_budget_bytes=None):
    """x: (B, C, HW) -> (B, C) mean over HW. NCHW-native: no transpose required."""
    B, C, HW = x_bc_hw.shape
    dtype = x_bc_hw.dtype
    itemsize = jnp.dtype(dtype).itemsize
    sub = _sublane(dtype)
    vmem_cap, n_cores = _tpu_vmem_and_cores()

    # Double-buffered input budget: ~1/4 of physical VMEM, clamped to 12..48 MiB
    # (-> ~16 MiB on v7x, ~32 MiB on v5e/v6e).
    budget = min(max(vmem_cap // 4, 12 << 20), 48 << 20)
    if vmem_budget_bytes is not None:
        budget = int(vmem_budget_bytes)

    def in_block_bytes(bt, ct, hwt):
        # Padded VMEM footprint of one input tile (sublane / lane rounding).
        return bt * _round_up(ct, sub) * _round_up(hwt, 128) * itemsize

    bt_min = B if B < 8 else 8
    Ct, HWt = C, HW

    if 2 * in_block_bytes(bt_min, C, HW) <= budget:
        # Whole (C, HW) plane fits: grow the batch tile, never past B.
        per_img = in_block_bytes(1, C, HW)
        bt_fit = budget // (2 * per_img)
        if bt_fit >= B:
            Bt = B
        else:
            Bt = max(8, min((bt_fit // 8) * 8, (B // 8) * 8))
    else:
        # One batch tile of full (C, HW) is too big: split HW (and C if needed).
        Bt = bt_min
        if HW > 128:
            hw_fit = budget // (2 * Bt * _round_up(C, sub) * itemsize)
            HWt = max(128, (hw_fit // 128) * 128)
            if HWt >= HW:
                HWt = HW
        if 2 * in_block_bytes(Bt, C, HWt) > budget and C > 128:
            c_fit = budget // (2 * Bt * _round_up(HWt, 128) * itemsize)
            Ct = max(128, (c_fit // 128) * 128)
            if Ct >= C:
                Ct = C

    nb, nc, nh = pl.cdiv(B, Bt), pl.cdiv(C, Ct), pl.cdiv(HW, HWt)

    # Megacore: ensure a 2-TensorCore chip (v7x) sees >=2 parallel grid steps.
    if n_cores >= 2 and nb * nc < 2:
        if B >= 16:
            Bt = _round_up(pl.cdiv(B, 2), 8)
            nb = pl.cdiv(B, Bt)
        elif C >= 256:
            Ct = _round_up(pl.cdiv(C, 2), 128)
            nc = pl.cdiv(C, Ct)

    ragged = (HW % HWt) != 0

    # Explicit scoped-VMEM limit from the padded, double-buffered footprint.
    in_blk = in_block_bytes(Bt, Ct, HWt)
    out_blk = _round_up(Bt, sub) * _round_up(Ct, 128) * itemsize
    acc_blk = _round_up(Bt, 8) * _round_up(Ct, 128) * 4
    need = 2 * in_blk + 2 * out_blk + acc_blk
    vmem_limit = max(int(need * 3 // 2) + (4 << 20), 32 << 20)
    vmem_limit = min(vmem_limit, max(32 << 20, vmem_cap * 3 // 4))

    kernel = functools.partial(
        _gap_kernel, inv_hw=1.0 / HW, hw_total=HW, hw_tile=HWt, ragged=ragged)

    return pl.pallas_call(
        kernel,
        out_shape=jax.ShapeDtypeStruct((B, C), dtype),
        grid=(nb, nc, nh),
        in_specs=[pl.BlockSpec((Bt, Ct, HWt), lambda b, c, h: (b, c, h))],
        out_specs=pl.BlockSpec((Bt, Ct), lambda b, c, h: (b, c)),
        scratch_shapes=[pltpu.VMEM((Bt, Ct), jnp.float32)],
        compiler_params=pltpu.CompilerParams(
            dimension_semantics=("parallel", "parallel", "arbitrary"),
            vmem_limit_bytes=int(vmem_limit),
        ),
    )(x_bc_hw)


def global_avg_pool_2d(x_nchw, **kw):
    """x_nchw: (B, C, H, W) (PyTorch layout) -> (B, C) mean over H*W.

    The (B, C, H, W) -> (B, C, H*W) reshape merges contiguous trailing dims and
    is metadata-only; no HBM transpose is performed.
    """
    B, C, H, W = x_nchw.shape
    return global_avg_pool_nchw(x_nchw.reshape(B, C, H * W), **kw)


if __name__ == "__main__":
    key = jax.random.PRNGKey(0)

    # Small NCHW input consistent with the module.
    B, C, H, W = 2, 4, 16, 16
    x = jax.random.normal(key, (B, C, H, W), dtype=jnp.float32)
    out = jax.block_until_ready(global_avg_pool_2d(x))
    ref = jnp.mean(x.reshape(B, C, -1), axis=2)
    assert out.shape == (B, C), out.shape
    assert jnp.allclose(out, ref, atol=1e-5, rtol=1e-5)

    # bf16, 7x7 head-shaped feature map; exercises f32 accumulation and the
    # megacore channel split (C=256 -> two 128-channel parallel steps).
    B2, C2, H2, W2 = 2, 256, 7, 7
    x2 = jax.random.normal(jax.random.PRNGKey(1), (B2, C2, H2, W2),
                           dtype=jnp.float32).astype(jnp.bfloat16)
    out2 = jax.block_until_ready(global_avg_pool_2d(x2))
    ref2 = jnp.mean(x2.astype(jnp.float32).reshape(B2, C2, -1), axis=2)
    assert out2.shape == (B2, C2), out2.shape
    assert jnp.allclose(out2.astype(jnp.float32), ref2, atol=1e-2, rtol=1e-2)

    # Force the HW-split accumulator path (with ragged lane masking) via a tiny
    # artificial VMEM budget, validating the big-activation code path.
    B3, C3, H3, W3 = 2, 8, 20, 20          # HW=400 -> HWt=128, ragged last tile
    x3 = jax.random.normal(jax.random.PRNGKey(2), (B3, C3, H3, W3),
                           dtype=jnp.float32)
    out3 = jax.block_until_ready(global_avg_pool_2d(x3, vmem_budget_bytes=16 * 1024))
    ref3 = jnp.mean(x3.reshape(B3, C3, -1), axis=2)
    assert jnp.allclose(out3, ref3, atol=1e-5, rtol=1e-5)

    print("KERNEL_OK")
</pallas_src>

<mosaic_0001>
module attributes {stable_mosaic.version = 11 : i64} {
  func.func @_gap_kernel(%arg0: i32, %arg1: i32, %arg2: i32, %arg3: memref<2x4x256xf32, #tpu.memory_space<vmem>>, %arg4: memref<2x4xf32, #tpu.memory_space<vmem>>, %arg5: memref<2x4xf32, #tpu.memory_space<vmem>>) attributes {dimension_semantics = [#tpu.dimension_semantics<parallel>, #tpu.dimension_semantics<parallel>, #tpu.dimension_semantics<arbitrary>], iteration_bounds = array<i64: 1, 1, 1>, scalar_prefetch = 0 : i64, scratch_operands = 1 : i64, tpu.core_type = #tpu.core_type<tc>, window_params = [{transform_indices = @transform_0, window_bounds = array<i64: 2, 4, 256>}, {transform_indices = @transform_1, window_bounds = array<i64: 2, 4>}]} {
    %c0_i32 = arith.constant 0 : i32
    %0 = arith.cmpi eq, %arg2, %c0_i32 : i32
    %1 = arith.extui %0 : i1 to i32
    %c0_i32_0 = arith.constant 0 : i32
    %2 = arith.cmpi ne, %1, %c0_i32_0 : i32
    scf.if %2 {
      %cst_9 = arith.constant 0.000000e+00 : f32
      %11 = vector.broadcast %cst_9 : f32 to vector<2x4xf32>
      %c0_10 = arith.constant 0 : index
      %c0_11 = arith.constant 0 : index
      %12 = vector.load %arg5[%c0_10, %c0_11] : memref<2x4xf32, #tpu.memory_space<vmem>>, vector<2x4xf32>
      tpu.vector_store %arg5[%c0_10, %c0_11], %11 {strides = array<i32>} : memref<2x4xf32, #tpu.memory_space<vmem>>, vector<2x4xf32>,
    } else {
    }
    %c0 = arith.constant 0 : index
    %c0_1 = arith.constant 0 : index
    %c0_2 = arith.constant 0 : index
    %3 = vector.load %arg3[%c0, %c0_1, %c0_2] : memref<2x4x256xf32, #tpu.memory_space<vmem>>, vector<2x4x256xf32>
    %c0_3 = arith.constant 0 : index
    %c0_4 = arith.constant 0 : index
    %4 = vector.load %arg5[%c0_3, %c0_4] : memref<2x4xf32, #tpu.memory_space<vmem>>, vector<2x4xf32>
    %cst = arith.constant dense<0.000000e+00> : vector<2x4xf32>
    %5 = vector.multi_reduction <add>, %3, %cst [2] : vector<2x4x256xf32> to vector<2x4xf32>
    %6 = arith.addf %4, %5 : vector<2x4xf32>
    %c0_5 = arith.constant 0 : index
    %c0_6 = arith.constant 0 : index
    %7 = vector.load %arg5[%c0_5, %c0_6] : memref<2x4xf32, #tpu.memory_space<vmem>>, vector<2x4xf32>
    tpu.vector_store %arg5[%c0_5, %c0_6], %6 {strides = array<i32>} : memref<2x4xf32, #tpu.memory_space<vmem>>, vector<2x4xf32>,
    %c0_i32_7 = arith.constant 0 : i32
    %8 = arith.cmpi eq, %arg2, %c0_i32_7 : i32
    %9 = arith.extui %8 : i1 to i32
    %c0_i32_8 = arith.constant 0 : i32
    %10 = arith.cmpi ne, %9, %c0_i32_8 : i32
    scf.if %10 {
      %c0_9 = arith.constant 0 : index
      %c0_10 = arith.constant 0 : index
      %11 = vector.load %arg5[%c0_9, %c0_10] : memref<2x4xf32, #tpu.memory_space<vmem>>, vector<2x4xf32>
      %cst_11 = arith.constant 3.906250e-03 : f32
      %12 = vector.broadcast %cst_11 : f32 to vector<2x4xf32>
      %13 = arith.mulf %11, %12 : vector<2x4xf32>
      %c0_12 = arith.constant 0 : index
      %c0_13 = arith.constant 0 : index
      %14 = vector.load %arg4[%c0_12, %c0_13] : memref<2x4xf32, #tpu.memory_space<vmem>>, vector<2x4xf32>
      tpu.vector_store %arg4[%c0_12, %c0_13], %13 {strides = array<i32>} : memref<2x4xf32, #tpu.memory_space<vmem>>, vector<2x4xf32>,
    } else {
    }
    return
  }
  func.func @transform_0(%arg0: i32, %arg1: i32, %arg2: i32) -> (i32, i32, i32) {
    %c0_i32 = arith.constant 0 : i32
    return %arg0, %arg1, %arg2 : i32, i32, i32
  }
  func.func @transform_1(%arg0: i32, %arg1: i32, %arg2: i32) -> (i32, i32) {
    %c0_i32 = arith.constant 0 : i32
    return %arg0, %arg1 : i32, i32
  }
}

</mosaic_0001>

<llo_original>
// kernel: tpu_custom_call.1
$region0: #{tpu_custom_call.1}
  #allocation0 [shape = 'u32[]', space=smem, size = 0x4, offset = 0x4, fixed_abs, tag = 'smem constant byte address 0x4 - core index']
  #allocation1 [shape = 'u32[72,128]{1,0:T(1,128)}', space=vmem, size = 0x9000, scoped, tag = 'internal scratch']
  #allocation2 [shape = 'f32[2,4]{1,0:T(2,128)}', space=vmem, size = 0x400, scoped, tag = 'scratch operand']
  %s0 = inlined_call_operand.hbm [shape: f32[2,4,256], index: 0, kind: input, shape index: {}]
  %s1 = inlined_call_operand.hbm [shape: f32[2,4], index: 1, kind: output, shape index: {}]
  %s2 = sld [smem:[#allocation0]]
  $region26: #{tpu_custom_call.1} parent=0
    _
  %s4 = ssub.s32 1, %s2
  %s5 = scalar_select 0, %s4, %s2
  $region1: #{tpu_custom_call.1} parent=0
    #allocation3 [shape = 'u8[8192]{0}', space=vmem, size = 0x2000, scoped, tag = 'input window, operand 0, single buffered']
    #allocation4 [shape = 's32[1]{0}', space=sflag, size = 0x4, scoped, tag = 'scoped memory for tpu_custom_call.1']
    #allocation5 [shape = 's32[1]{0}', space=sflag, size = 0x4, scoped, tag = 'scoped memory for tpu_custom_call.1']
    #allocation6 [shape = 'u8[1024]{0}', space=vmem, size = 0x400, scoped, tag = 'output window, operand 0, single buffered']
    %6 = vsyncpa [#allocation4], 0
    %7 = vsyncpa [#allocation5], 0
    // Predicated region
    $region2: #{tpu_custom_call.1} parent=1 // pred_check
      _
    $region3: #{tpu_custom_call.1} parent=1 // pred_check_branch
      %9 = sbr.rel (0) target = $region5
    $region4: #{tpu_custom_call.1} parent=1 // pred_region
      %11 = vsyncadd [#allocation4], 0
      %s12 = sshll.u32 %s0, 4
      %s13 = int_to_ptr.hbm [resolvable:$true] %s12
      %s14 = sshll.u32 [#allocation3], 4
      %s15 = int_to_ptr.vmem [resolvable:$true] %s14
      %20 = dma.hbm_to_vmem [thread:$0]  %s13, 256, %s15, [#allocation4], 128, 128, 8
    $region5: #{tpu_custom_call.1} parent=1 // pred_fallthru
      _
    // Predicated region
    $region6: #{tpu_custom_call.1} parent=1 // pred_check
      _
    $region7: #{tpu_custom_call.1} parent=1 // pred_check_branch
      %22 = sbr.rel (0) target = $region9
    $region8: #{tpu_custom_call.1} parent=1 // pred_region
      %24 = dma.done [#allocation4], 256
    $region9: #{tpu_custom_call.1} parent=1 // pred_fallthru
      _
    %p25 = scmp.eq.s32.totalorder 0, 0
    // Predicated region
    $region10: #{tpu_custom_call.1} parent=1 // pred_check
      %p26 = pneg %p25
    $region11: #{tpu_custom_call.1} parent=1 // pred_check_branch
      %28 = sbr.rel (%p26) target = $region13
    $region12: #{tpu_custom_call.1} parent=1 // pred_region
      %vm29 = vcmask 25600
      %30 = vst.msk [vmem:[#allocation2] sm:$0x3] %vm29, 0.0
    $region13: #{tpu_custom_call.1} parent=1 // pred_fallthru
      _
    %v31 = vld [vmem:[#allocation3] sm:$0xff]
    %v32 = vld [vmem:[#allocation3 + $0x8] sm:$0xff]
    %v33 = vld [vmem:[#allocation2] sm:$0x3]
    %36 = vst [vmem:[#allocation1] ss:$2 sm:$0xff] %v31
    %v37 = vld.sshfl [vmem:[#allocation1] sm:$0xff pattern:$0x75316420]
    %v38 = vld.sshfl [vmem:[#allocation1 + $0x8] sm:$0xff pattern:$0x75316420]
    %s39 = scalar_lea.vmem [#allocation1], 16
    %40 = vst [vmem:[%s39] ss:$2 sm:$0xff] %v32
    %v41 = vld.sshfl [vmem:[#allocation1 + $0x10] sm:$0xff pattern:$0x75316420]
    %v42 = vld.sshfl [vmem:[#allocation1 + $0x18] sm:$0xff pattern:$0x75316420]
    %vm47 = vcmask 1043456
    %v48 = vsel %vm47, %v37, 0.0
    %v49 = vsel %vm47, %v38, 0.0
    %v50 = vadd.f32 %v48, %v49
    %51 = vadd.xlane.f32.xlu0 %v50
    %v52 = vpop.xlane.xlu0 %51
    %v53 = vsel %vm47, %v41, 0.0
    %v54 = vsel %vm47, %v42, 0.0
    %v55 = vadd.f32 %v53, %v54
    %56 = vadd.xlane.f32.xlu0 %v55
    %v57 = vpop.xlane.xlu0 %56
    %v60 = vlaneseq
    %v61 = vand.u32 %v60, 127
    %v62 = vperm.slane %v52, %v61
    %v63 = vperm.slane %v57, %v61
    %vm64 = vcmask 1041409
    %v65 = vsel %vm64, %v63, %v62
    %v67 = vadd.f32 %v33, %v65
    %vm68 = vcmask 25600
    %69 = vst.msk [vmem:[#allocation2] sm:$0x3] %vm68, %v67
    // Predicated region
    $region14: #{tpu_custom_call.1} parent=1 // pred_check
      %p70 = pneg %p25
    $region15: #{tpu_custom_call.1} parent=1 // pred_check_branch
      %72 = sbr.rel (%p70) target = $region17
    $region16: #{tpu_custom_call.1} parent=1 // pred_region
      %v73 = vld [vmem:[#allocation2] sm:$0x3]
      %v74 = vmul.f32 %v73, 0.00390625
      %75 = vst.msk [vmem:[#allocation6] sm:$0x3] %vm68, %v74
    $region17: #{tpu_custom_call.1} parent=1 // pred_fallthru
      _
    // Predicated region
    $region18: #{tpu_custom_call.1} parent=1 // pred_check
      _
    $region19: #{tpu_custom_call.1} parent=1 // pred_check_branch
      %77 = sbr.rel (0) target = $region21
    $region20: #{tpu_custom_call.1} parent=1 // pred_region
      %79 = vsyncadd [#allocation5], 0
      %s81 = sshll.u32 [#allocation6], 4
      %s82 = int_to_ptr.vmem [resolvable:$true] %s81
      %s83 = sshll.u32 %s1, 4
      %s84 = int_to_ptr.hbm [resolvable:$true] %s83
      %86 = dma.vmem_to_hbm [thread:$0]  %s82, 32, %s84, [#allocation5]
    $region21: #{tpu_custom_call.1} parent=1 // pred_fallthru
      _
    // Predicated region
    $region22: #{tpu_custom_call.1} parent=1 // pred_check
      _
    $region23: #{tpu_custom_call.1} parent=1 // pred_check_branch
      %88 = sbr.rel (0) target = $region25
    $region24: #{tpu_custom_call.1} parent=1 // pred_region
      %90 = dma.done [#allocation5], 32
    $region25: #{tpu_custom_call.1} parent=1 // pred_fallthru
      _
    %91 = vsyncpa [#allocation4], 1
    %92 = vsyncpa [#allocation5], 1

</llo_original>
